<compile_context>
chip_gen: v7x
topology: tpu7x:2x2x1
jax: 0.10.0
libtpu: 0.0.40
codegen_flags: <defaults>
</compile_context>

<pallas_src>
import functools

import jax
import jax.numpy as jnp
from jax.experimental import pallas as pl
from jax.experimental.pallas import tpu as pltpu

_LANE = 128
_SUBLANE = 8


@functools.lru_cache(maxsize=None)
def _vmem_budget():
    """Generation-aware (per-block byte budget, scoped-VMEM limit)."""
    try:
        cap = pltpu.get_tpu_info().vmem_capacity_bytes
    except Exception:
        cap = 64 * 1024 * 1024  # conservative fallback: assume v7x-sized VMEM
    if cap >= 96 * 1024 * 1024:
        # v5e / v6e: 128 MiB physical VMEM -> big tiles amortize the ~0.35us/step cost.
        return 6 * 1024 * 1024, 80 * 1024 * 1024
    # v7x: 64 MiB per TensorCore -> smaller blocks + headroom for MAC temporaries.
    return 3 * 1024 * 1024, 44 * 1024 * 1024


def _make_kernel(KH, KW, TILE_H, W_pad):
    """Build the per-row-tile kernel body for static shapes."""
    BODY = TILE_H - (KH - 1)   # output rows computed purely from the main x block
    TAIL = KH - 1              # output rows that also need the halo rows below

    def _taps(rows_fn, w, bias):
        # rows_fn(di) -> f32 view of input rows di .. di+n-1 (n = BODY or TAIL).
        acc = None
        for di in range(KH):
            row = rows_fn(di)
            for dj in range(KW):
                if dj == 0:
                    shifted = row
                else:
                    # Lane shift on the XLU: shifted[:, j] == row[:, j + dj] for every
                    # valid output column; wrapped lanes land in the discarded padding
                    # (safe because W_pad >= W, asserted in the wrapper).
                    shifted = pltpu.roll(row, shift=W_pad - dj, axis=1)
                term = w[di * KW + dj] * shifted
                # Fold the bias into the very first tap (no jnp.full broadcast pass).
                acc = (term + bias) if acc is None else (acc + term)
        return acc

    def kernel(w_ref, b_ref, x_ref, halo_ref, o_ref):
        # Read every filter tap and the bias from SMEM once, outside the MAC loops.
        w = [w_ref[t] for t in range(KH * KW)]
        bias = b_ref[0]

        # ---- body rows: all inputs come straight from x_ref (no scratch copy). ----
        if BODY > 0:
            body = _taps(
                lambda di: x_ref[pl.ds(di, BODY), :].astype(jnp.float32), w, bias)
            o_ref[pl.ds(0, BODY), :] = body.astype(o_ref.dtype)

        # ---- tail rows: the last KH-1 output rows also need halo rows below. ----
        if TAIL > 0:
            def tail_rows(di):
                n_from_x = TAIL - di           # rows still inside the main block
                parts = []
                if n_from_x > 0:
                    parts.append(x_ref[pl.ds(BODY + di, n_from_x), :])
                if di > 0:
                    parts.append(halo_ref[pl.ds(0, di), :])
                v = parts[0] if len(parts) == 1 else jnp.concatenate(parts, axis=0)
                return v.astype(jnp.float32)

            tail = _taps(tail_rows, w, bias)
            o_ref[pl.ds(BODY, TAIL), :] = tail.astype(o_ref.dtype)

    return kernel


@functools.partial(jax.jit, static_argnames=("max_tile_rows",))
def conv2d_forward(x, weight, bias, *, max_tile_rows=None):
    """Equivalent of Conv2D.forward: corr2d(x, weight) + bias."""
    if x.dtype != jnp.float32:
        # TODO(synk): sub-32-bit dtypes need (16,128)/(32,128) packed row tiling;
        # compute in f32 (matches the PyTorch module, which is f32).
        x = x.astype(jnp.float32)

    H, W = x.shape
    KH, KW = weight.shape
    if H < KH or W < KW:
        raise ValueError("input smaller than kernel")
    OH, OW = H - KH + 1, W - KW + 1

    # Lane-dense width (multiple of 128) and sublane-aligned halo (>= KH-1, mult of 8).
    W_pad = max(_LANE, pl.cdiv(W, _LANE) * _LANE)
    HALO = max(_SUBLANE, pl.cdiv(KH - 1, _SUBLANE) * _SUBLANE)

    # Roll-trick safety: wrapped lanes from the per-tap pltpu.roll land in columns
    # >= W_pad - (KW-1); those must be outside the valid output (>= OW), which holds
    # exactly when W_pad >= W.  Keep this assert so a future change to the W_pad
    # rounding (or huge KW) cannot silently corrupt the last output columns.
    assert W_pad >= W and W_pad - (KW - 1) >= OW

    # Generation-aware row-tile budget (f32 bytes per x / output block).
    block_budget, vmem_limit = _vmem_budget()
    if max_tile_rows is None:
        max_tile_rows = max(HALO, block_budget // (W_pad * 4))
    max_blocks = max(1, max_tile_rows // HALO)

    halo_blocks = pl.cdiv(OH, HALO)
    if halo_blocks > 1:
        # Guarantee >= 2 row tiles so ("parallel",) can use both v7x TensorCores.
        max_blocks = min(max_blocks, pl.cdiv(halo_blocks, 2))
    TILE_H = min(max_blocks, halo_blocks) * HALO
    num_tiles = pl.cdiv(OH, TILE_H)
    OH_pad = num_tiles * TILE_H
    H_pad = OH_pad + HALO   # padded x rows cover every main block and its halo block

    # Zero-pad only when not already aligned (pad/slice are extra full HBM passes).
    if (H_pad, W_pad) == (H, W):
        x_pad = x
    else:
        x_pad = jnp.pad(x, ((0, H_pad - H), (0, W_pad - W)))

    w_flat = weight.reshape(-1).astype(jnp.float32)  # 1-D SMEM: avoids (8,128) padding
    b_flat = bias.reshape(-1).astype(jnp.float32)

    kernel = _make_kernel(KH, KW, TILE_H, W_pad)
    out_pad = pl.pallas_call(
        kernel,
        out_shape=jax.ShapeDtypeStruct((OH_pad, W_pad), jnp.float32),
        grid=(num_tiles,),
        in_specs=[
            pl.BlockSpec(memory_space=pltpu.SMEM),                    # weight (KH*KW,)
            pl.BlockSpec(memory_space=pltpu.SMEM),                    # bias (1,)
            pl.BlockSpec((TILE_H, W_pad), lambda i: (i, 0)),          # main x row tile
            pl.BlockSpec((HALO, W_pad),
                         lambda i: ((i + 1) * (TILE_H // HALO), 0)),  # halo rows below
        ],
        out_specs=pl.BlockSpec((TILE_H, W_pad), lambda i: (i, 0)),    # lane-dense out
        compiler_params=pltpu.CompilerParams(
            dimension_semantics=("parallel",),  # independent row tiles
            vmem_limit_bytes=vmem_limit,
        ),
    )(w_flat, b_flat, x_pad, x_pad)

    # Slice the valid region off the lane-padded result unless it already matches.
    if (OH, OW) == (OH_pad, W_pad):
        return out_pad
    return out_pad[:OH, :OW]


def _corr2d_reference(x, weight, bias):
    """Pure-JAX reference (same semantics as the PyTorch corr2d loops)."""
    H, W = x.shape
    KH, KW = weight.shape
    OH, OW = H - KH + 1, W - KW + 1
    y = jnp.zeros((OH, OW), jnp.float32)
    for i in range(KH):
        for j in range(KW):
            y = y + weight[i, j] * x[i:i + OH, j:j + OW]
    return y + bias[0]


if __name__ == "__main__":
    key = jax.random.PRNGKey(0)
    k_w, k_x, k_x2, k_x3, k_x4 = jax.random.split(key, 5)

    kernel_size = (2, 2)
    # nn.Parameter(torch.rand(kernel_size)) -> uniform [0, 1)
    weight = jax.random.uniform(k_w, kernel_size, dtype=jnp.float32)
    # nn.Parameter(torch.zeros(1))
    bias = jnp.zeros((1,), dtype=jnp.float32)

    # Small 2-D input consistent with the module's 2-D forward.
    x = jax.random.normal(k_x, (16, 16), dtype=jnp.float32)
    y = conv2d_forward(x, weight, bias)
    jax.block_until_ready(y)
    y_ref = _corr2d_reference(x, weight, bias)
    assert y.shape == (15, 15)
    assert jnp.allclose(y, y_ref, atol=1e-5, rtol=1e-5)

    # Multiple row tiles with a tiny forced tile (TILE_H=8): exercises halo/grid path.
    x2 = jax.random.normal(k_x2, (40, 20), dtype=jnp.float32)
    y2 = conv2d_forward(x2, weight, bias, max_tile_rows=8)
    jax.block_until_ready(y2)
    y2_ref = _corr2d_reference(x2, weight, bias)
    assert y2.shape == (39, 19)
    assert jnp.allclose(y2, y2_ref, atol=1e-5, rtol=1e-5)

    # Default budget, >1 lane block and the forced >=2-tile split (v7x megacore path).
    x3 = jax.random.normal(k_x3, (70, 200), dtype=jnp.float32)
    y3 = conv2d_forward(x3, weight, bias)
    jax.block_until_ready(y3)
    y3_ref = _corr2d_reference(x3, weight, bias)
    assert y3.shape == (69, 199)
    assert jnp.allclose(y3, y3_ref, atol=1e-5, rtol=1e-5)

    # KH == 1 edge case, mirroring the spec's K = [[1., -1.]] on a 6x8 image.
    w_edge = jnp.array([[1.0, -1.0]], dtype=jnp.float32)
    x4 = jax.random.normal(k_x4, (6, 8), dtype=jnp.float32)
    y4 = conv2d_forward(x4, w_edge, bias)
    jax.block_until_ready(y4)
    y4_ref = _corr2d_reference(x4, w_edge, bias)
    assert y4.shape == (6, 7)
    assert jnp.allclose(y4, y4_ref, atol=1e-5, rtol=1e-5)

    print("KERNEL_OK")
</pallas_src>

<mosaic_0001>
module attributes {stable_mosaic.version = 11 : i64} {
  func.func @kernel(%arg0: i32, %arg1: memref<4xf32, #tpu.memory_space<smem>>, %arg2: memref<1xf32, #tpu.memory_space<smem>>, %arg3: memref<8x128xf32, #tpu.memory_space<vmem>>, %arg4: memref<8x128xf32, #tpu.memory_space<vmem>>, %arg5: memref<8x128xf32, #tpu.memory_space<vmem>>) attributes {dimension_semantics = [#tpu.dimension_semantics<parallel>], iteration_bounds = array<i64: 2>, scalar_prefetch = 0 : i64, scratch_operands = 0 : i64, tpu.core_type = #tpu.core_type<tc>, window_params = [{transform_indices = @transform_0, window_bounds = array<i64: 4>}, {transform_indices = @transform_1, window_bounds = array<i64: 1>}, {transform_indices = @transform_2, window_bounds = array<i64: 8, 128>}, {transform_indices = @transform_3, window_bounds = array<i64: 8, 128>}, {transform_indices = @transform_4, window_bounds = array<i64: 8, 128>}]} {
    %c0 = arith.constant 0 : index
    %0 = memref.load %arg1[%c0] : memref<4xf32, #tpu.memory_space<smem>>
    %c1 = arith.constant 1 : index
    %1 = memref.load %arg1[%c1] : memref<4xf32, #tpu.memory_space<smem>>
    %c2 = arith.constant 2 : index
    %2 = memref.load %arg1[%c2] : memref<4xf32, #tpu.memory_space<smem>>
    %c3 = arith.constant 3 : index
    %3 = memref.load %arg1[%c3] : memref<4xf32, #tpu.memory_space<smem>>
    %c0_0 = arith.constant 0 : index
    %4 = memref.load %arg2[%c0_0] : memref<1xf32, #tpu.memory_space<smem>>
    %c0_1 = arith.constant 0 : index
    %c0_2 = arith.constant 0 : index
    %5 = vector.load %arg3[%c0_1, %c0_2] : memref<8x128xf32, #tpu.memory_space<vmem>>, vector<7x128xf32>
    %6 = vector.broadcast %0 : f32 to vector<7x128xf32>
    %7 = arith.mulf %6, %5 : vector<7x128xf32>
    %8 = vector.broadcast %4 : f32 to vector<7x128xf32>
    %9 = arith.addf %7, %8 : vector<7x128xf32>
    %c127_i32 = arith.constant 127 : i32
    %10 = tpu.dynamic_rotate %5 by %c127_i32 dim 1 : vector<7x128xf32>, i32 -> vector<7x128xf32>
    %11 = vector.broadcast %1 : f32 to vector<7x128xf32>
    %12 = arith.mulf %11, %10 : vector<7x128xf32>
    %13 = arith.addf %9, %12 : vector<7x128xf32>
    %c1_3 = arith.constant 1 : index
    %c0_4 = arith.constant 0 : index
    %14 = vector.load %arg3[%c1_3, %c0_4] : memref<8x128xf32, #tpu.memory_space<vmem>>, vector<7x128xf32>
    %15 = vector.broadcast %2 : f32 to vector<7x128xf32>
    %16 = arith.mulf %15, %14 : vector<7x128xf32>
    %17 = arith.addf %13, %16 : vector<7x128xf32>
    %c127_i32_5 = arith.constant 127 : i32
    %18 = tpu.dynamic_rotate %14 by %c127_i32_5 dim 1 : vector<7x128xf32>, i32 -> vector<7x128xf32>
    %19 = vector.broadcast %3 : f32 to vector<7x128xf32>
    %20 = arith.mulf %19, %18 : vector<7x128xf32>
    %21 = arith.addf %17, %20 : vector<7x128xf32>
    %c0_6 = arith.constant 0 : index
    %c0_7 = arith.constant 0 : index
    %22 = vector.load %arg5[%c0_6, %c0_7] : memref<8x128xf32, #tpu.memory_space<vmem>>, vector<7x128xf32>
    tpu.vector_store %arg5[%c0_6, %c0_7], %21 {strides = array<i32>} : memref<8x128xf32, #tpu.memory_space<vmem>>, vector<7x128xf32>,
    %c7 = arith.constant 7 : index
    %c0_8 = arith.constant 0 : index
    %23 = vector.load %arg3[%c7, %c0_8] : memref<8x128xf32, #tpu.memory_space<vmem>>, vector<1x128xf32>
    %24 = vector.broadcast %0 : f32 to vector<1x128xf32>
    %25 = arith.mulf %24, %23 : vector<1x128xf32>
    %26 = vector.broadcast %4 : f32 to vector<1x128xf32>
    %27 = arith.addf %25, %26 : vector<1x128xf32>
    %c127_i32_9 = arith.constant 127 : i32
    %28 = tpu.dynamic_rotate %23 by %c127_i32_9 dim 1 : vector<1x128xf32>, i32 -> vector<1x128xf32>
    %29 = vector.broadcast %1 : f32 to vector<1x128xf32>
    %30 = arith.mulf %29, %28 : vector<1x128xf32>
    %31 = arith.addf %27, %30 : vector<1x128xf32>
    %c0_10 = arith.constant 0 : index
    %c0_11 = arith.constant 0 : index
    %32 = vector.load %arg4[%c0_10, %c0_11] : memref<8x128xf32, #tpu.memory_space<vmem>>, vector<1x128xf32>
    %33 = vector.broadcast %2 : f32 to vector<1x128xf32>
    %34 = arith.mulf %33, %32 : vector<1x128xf32>
    %35 = arith.addf %31, %34 : vector<1x128xf32>
    %c127_i32_12 = arith.constant 127 : i32
    %36 = tpu.dynamic_rotate %32 by %c127_i32_12 dim 1 : vector<1x128xf32>, i32 -> vector<1x128xf32>
    %37 = vector.broadcast %3 : f32 to vector<1x128xf32>
    %38 = arith.mulf %37, %36 : vector<1x128xf32>
    %39 = arith.addf %35, %38 : vector<1x128xf32>
    %c7_13 = arith.constant 7 : index
    %c0_14 = arith.constant 0 : index
    %40 = vector.load %arg5[%c7_13, %c0_14] : memref<8x128xf32, #tpu.memory_space<vmem>>, vector<1x128xf32>
    tpu.vector_store %arg5[%c7_13, %c0_14], %39 {strides = array<i32>} : memref<8x128xf32, #tpu.memory_space<vmem>>, vector<1x128xf32>,
    return
  }
  func.func @transform_0(%arg0: i32) -> i32 {
    %c0_i32 = arith.constant 0 : i32
    %c0_i32_0 = arith.constant 0 : i32
    return %c0_i32 : i32
  }
  func.func @transform_1(%arg0: i32) -> i32 {
    %c0_i32 = arith.constant 0 : i32
    %c0_i32_0 = arith.constant 0 : i32
    return %c0_i32 : i32
  }
  func.func @transform_2(%arg0: i32) -> (i32, i32) {
    %c0_i32 = arith.constant 0 : i32
    %c0_i32_0 = arith.constant 0 : i32
    return %arg0, %c0_i32 : i32, i32
  }
  func.func @transform_3(%arg0: i32) -> (i32, i32) {
    %c1_i32 = arith.constant 1 : i32
    %0 = arith.addi %arg0, %c1_i32 : i32
    %c1_i32_0 = arith.constant 1 : i32
    %1 = arith.muli %0, %c1_i32_0 : i32
    %c0_i32 = arith.constant 0 : i32
    %c0_i32_1 = arith.constant 0 : i32
    return %1, %c0_i32 : i32, i32
  }
  func.func @transform_4(%arg0: i32) -> (i32, i32) {
    %c0_i32 = arith.constant 0 : i32
    %c0_i32_0 = arith.constant 0 : i32
    return %arg0, %c0_i32 : i32, i32
  }
}

</mosaic_0001>

<llo_original>
// kernel: conv2d_forward.1
$region0: #{conv2d_forward.1}
  #allocation0 [shape = 'u32[]', space=smem, size = 0x4, offset = 0x4, fixed_abs, tag = 'smem constant byte address 0x4 - core index']
  #allocation1 [shape = 'u32[144,128]{1,0:T(1,128)}', space=vmem, size = 0x12000, scoped, tag = 'internal scratch']
  #allocation2 [shape = 'f32[1]{0:T(128)S(6)}', space=smem, size = 0x200, scoped, tag = 'scoped memory for conv2d_forward.1']
  %s0 = inlined_call_operand.vmem [shape: f32[4], index: 0, kind: input, shape index: {}]
  %s1 = inlined_call_operand.<no memory space> [shape: f32[1], index: 1, kind: input, shape index: {}]
  %s2 = inlined_call_operand.vmem [shape: f32[24,128], index: 2, kind: input, shape index: {}, may-alias: {2,3}]
  %s3 = inlined_call_operand.vmem [shape: f32[24,128], index: 3, kind: input, shape index: {}, may-alias: {2,3}]
  %s4 = inlined_call_operand.hbm [shape: f32[16,128], index: 4, kind: output, shape index: {}]
  %s5 = sld [smem:[#allocation0]]
  $region53: #{conv2d_forward.1} parent=0
    _
  %s7 = ssub.s32 1, %s5
  %s8 = scalar_select 0, %s7, %s5
  %9 = sst [smem:[#allocation2]] %s1
  $region1: #{conv2d_forward.1} parent=0
    #allocation3 [shape = 'u8[512]{0}', space=smem, size = 0x200, scoped, tag = 'input window, operand 0, single buffered']
    #allocation4 [shape = 's32[2]{0}', space=sflag, size = 0x8, scoped, tag = 'scoped memory for conv2d_forward.1']
    #allocation5 [shape = 's32[2]{0}', space=sflag, size = 0x8, scoped, tag = 'scoped memory for conv2d_forward.1']
    #allocation6 [shape = 'u8[8192]{0}', space=vmem, size = 0x2000, scoped, tag = 'output window, operand 0']
    %10 = vsyncpa [#allocation5], 0
    %11 = vsyncpa [#allocation4], 0
    %s12 = scalar_lea.sflag [#allocation4], 1
    %13 = vsyncpa %s12, 0
    loop: start=0, step=1, limit=4
    $region2: #{conv2d_forward.1} parent=1 // loop_pre_header
      _
    $region3: #{conv2d_forward.1} parent=1 // loop_header
      %s15 = sphi 0, %s19
      %p16 = scmp.ge.s32.totalorder %s15, 4
      %s23 = sphi 0, %s23
      %s25 = sphi 0, %s23
      %s26 = sphi 0, %s25
      %s40 = sphi 0, %s26
      %s44 = sphi 0, %s44
      %s46 = sphi 0, %s44
      %s47 = sphi 0, %s46
      %s61 = sphi 0, %s47
      %s67 = sphi 0, %s69
      %s70 = sphi 0, %s67
      %s71 = sphi 0, %s70
      %s87 = sphi 0, %s71
      %s95 = sphi 0, %s97
      %s98 = sphi 0, %s95
      %s99 = sphi 0, %s98
      %s115 = sphi 0, %s99
      %s121 = sphi 0, %s123
      %s124 = sphi 0, %s121
      %s125 = sphi 0, %s124
      %s141 = sphi 0, %s125
    $region4: #{conv2d_forward.1} parent=1 // loop_header_branch
      %18 = sbr.rel (%p16) target = $region8
    $region5: #{conv2d_forward.1} parent=1 // loop_body
      %s20 = ssub.s32 %s15, 1
      %s21 = ssub.s32 %s15, 2
      %s22 = sadd.s32 %s15, 1
      %s24 = sadd.s32 %s23, 1
      %p27 = scmp.eq.s32.totalorder %s15, 1
      %p28 = scmp.ne.s32.totalorder %s23, %s25
      %p29 = scmp.eq.s32.totalorder %s15, 0
      %p30 = por %p28, %p29
      %p31 = scmp.ne.s32.totalorder %s23, %s25
      %p32 = scmp.eq.s32.totalorder %s20, 1
      %p33 = por %p31, %p32
      %p34 = scmp.ne.s32.totalorder %s25, %s26
      %p35 = scmp.eq.s32.totalorder %s20, 0
      %p36 = por %p34, %p35
      %p37 = scmp.ne.s32.totalorder %s25, %s26
      %p38 = scmp.eq.s32.totalorder %s21, 1
      %p39 = por %p37, %p38
      %p41 = scmp.ne.s32.totalorder %s26, %s40
      %p42 = scmp.eq.s32.totalorder %s21, 0
      %p43 = por %p41, %p42
      %s45 = sadd.s32 %s44, 1
      %p48 = scmp.eq.s32.totalorder %s15, 1
      %p49 = scmp.ne.s32.totalorder %s44, %s46
      %p50 = scmp.eq.s32.totalorder %s15, 0
      %p51 = por %p49, %p50
      %p52 = scmp.ne.s32.totalorder %s44, %s46
      %p53 = scmp.eq.s32.totalorder %s20, 1
      %p54 = por %p52, %p53
      %p55 = scmp.ne.s32.totalorder %s46, %s47
      %p56 = scmp.eq.s32.totalorder %s20, 0
      %p57 = por %p55, %p56
      %p58 = scmp.ne.s32.totalorder %s46, %s47
      %p59 = scmp.eq.s32.totalorder %s21, 1
      %p60 = por %p58, %p59
      %p62 = scmp.ne.s32.totalorder %s47, %s61
      %p63 = scmp.eq.s32.totalorder %s21, 0
      %p64 = por %p62, %p63
      %s65 = ssub.s32 %s15, %s22
      %p66 = scmp.eq.s32.totalorder %s65, 0
      %s68 = sadd.s32 %s67, 1
      %s69 = scalar_select %p66, %s67, %s68
      %p72 = pneg %p66
      %p73 = scmp.eq.s32.totalorder %s15, 1
      %p74 = por %p72, %p73
      %p75 = scmp.ne.s32.totalorder %s67, %s70
      %p76 = scmp.eq.s32.totalorder %s15, 0
      %p77 = por %p75, %p76
      %p78 = scmp.ne.s32.totalorder %s67, %s70
      %p79 = scmp.eq.s32.totalorder %s20, 1
      %p80 = por %p78, %p79
      %p81 = scmp.ne.s32.totalorder %s70, %s71
      %p82 = scmp.eq.s32.totalorder %s20, 0
      %p83 = por %p81, %p82
      %p84 = scmp.ne.s32.totalorder %s70, %s71
      %p85 = scmp.eq.s32.totalorder %s21, 1
      %p86 = por %p84, %p85
      %p88 = scmp.ne.s32.totalorder %s71, %s87
      %p89 = scmp.eq.s32.totalorder %s21, 0
      %p90 = por %p88, %p89
      %s91 = sadd.s32 %s15, 1
      %s92 = sadd.s32 %s22, 1
      %s93 = ssub.s32 %s91, %s92
      %p94 = scmp.eq.s32.totalorder %s93, 0
      %s96 = sadd.s32 %s95, 1
      %s97 = scalar_select %p94, %s95, %s96
      %p100 = pneg %p94
      %p101 = scmp.eq.s32.totalorder %s15, 1
      %p102 = por %p100, %p101
      %p103 = scmp.ne.s32.totalorder %s95, %s98
      %p104 = scmp.eq.s32.totalorder %s15, 0
      %p105 = por %p103, %p104
      %p106 = scmp.ne.s32.totalorder %s95, %s98
      %p107 = scmp.eq.s32.totalorder %s20, 1
      %p108 = por %p106, %p107
      %p109 = scmp.ne.s32.totalorder %s98, %s99
      %p110 = scmp.eq.s32.totalorder %s20, 0
      %p111 = por %p109, %p110
      %p112 = scmp.ne.s32.totalorder %s98, %s99
      %p113 = scmp.eq.s32.totalorder %s21, 1
      %p114 = por %p112, %p113
      %p116 = scmp.ne.s32.totalorder %s99, %s115
      %p117 = scmp.eq.s32.totalorder %s21, 0
      %p118 = por %p116, %p117
      %s119 = ssub.s32 %s15, %s22
      %p120 = scmp.eq.s32.totalorder %s119, 0
      %s122 = sadd.s32 %s121, 1
      %s123 = scalar_select %p120, %s121, %s122
      %p126 = pneg %p120
      %p127 = scmp.eq.s32.totalorder %s15, 1
      %p128 = por %p126, %p127
      %p129 = scmp.ne.s32.totalorder %s121, %s124
      %p130 = scmp.eq.s32.totalorder %s15, 0
      %p131 = por %p129, %p130
      %p132 = scmp.ne.s32.totalorder %s121, %s124
      %p133 = scmp.eq.s32.totalorder %s20, 1
      %p134 = por %p132, %p133
      %p135 = scmp.ne.s32.totalorder %s124, %s125
      %p136 = scmp.eq.s32.totalorder %s20, 0
      %p137 = por %p135, %p136
      %p138 = scmp.ne.s32.totalorder %s124, %s125
      %p139 = scmp.eq.s32.totalorder %s21, 1
      %p140 = por %p138, %p139
      %p142 = scmp.ne.s32.totalorder %s125, %s141
      %p143 = scmp.eq.s32.totalorder %s21, 0
      %p144 = por %p142, %p143
      %p145 = scmp.le.s32.totalorder 1, %s15
      %p146 = scmp.lt.s32.totalorder %s15, 3
      %p147 = pnand %p145, %p146
      %p148 = pneg %p147
      // Predicated region
      $region9: #{conv2d_forward.1} parent=5 // pred_check
        _
      $region10: #{conv2d_forward.1} parent=5 // pred_check_branch
        %150 = sbr.rel (%p147) target = $region12
      $region11: #{conv2d_forward.1} parent=5 // pred_region
        %s151 = ssub.s32 %s15, 1
        // Predicated region
        $region13: #{conv2d_forward.1} parent=11 // pred_check
          %p152 = pneg %p36
        $region14: #{conv2d_forward.1} parent=11 // pred_check_branch
          %154 = sbr.rel (%p152) target = $region16
        $region15: #{conv2d_forward.1} parent=11 // pred_region
          %s156 = ssub.s32 16, 16
          %157 = vsyncadd [#allocation5], %s156
          %s159 = sshll.u32 %s0, 4
          %s160 = int_to_ptr.vmem [resolvable:$true] %s159
          %162 = dma.vmem_to_smem %s160, 16, [#allocation3], [#allocation5]
        $region16: #{conv2d_forward.1} parent=11 // pred_fallthru
          _
        // Predicated region
        $region17: #{conv2d_forward.1} parent=11 // pred_check
          %p163 = pneg %p57
        $region18: #{conv2d_forward.1} parent=11 // pred_check_branch
          %165 = sbr.rel (%p163) target = $region20
        $region19: #{conv2d_forward.1} parent=11 // pred_region
          _
        $region20: #{conv2d_forward.1} parent=11 // pred_fallthru
          _
      $region12: #{conv2d_forward.1} parent=5 // pred_fallthru
        _
      %p166 = scmp.lt.s32.totalorder %s15, 2
      // Predicated region
      $region21: #{conv2d_forward.1} parent=5 // pred_check
        %p167 = pneg %p166
      $region22: #{conv2d_forward.1} parent=5 // pred_check_branch
        %169 = sbr.rel (%p167) target = $region24
      $region23: #{conv2d_forward.1} parent=5 // pred_region
        // Predicated region
        $region25: #{conv2d_forward.1} parent=23 // pred_check
          %p170 = pneg %p77
        $region26: #{conv2d_forward.1} parent=23 // pred_check_branch
          %172 = sbr.rel (%p170) target = $region28
        $region27: #{conv2d_forward.1} parent=23 // pred_region
          %p173 = scmp.lt.s32.totalorder %s15, 2
          %s174 = scalar_select %p173, %s15, 2
          %s175 = smul.addr %s174, 8
          %s176 = scalar_lea.vmem %s2, %s175
        $region28: #{conv2d_forward.1} parent=23 // pred_fallthru
          _
        // Predicated region
        $region29: #{conv2d_forward.1} parent=23 // pred_check
          %p177 = pneg %p105
        $region30: #{conv2d_forward.1} parent=23 // pred_check_branch
          %179 = sbr.rel (%p177) target = $region32
        $region31: #{conv2d_forward.1} parent=23 // pred_region
          %s180 = sadd.s32 %s15, 1
          %p181 = scmp.lt.s32.totalorder %s180, 2
          %s182 = scalar_select %p181, %s180, 2
          %s183 = smul.addr %s182, 8
          %s184 = scalar_lea.vmem %s3, %s183
          %s185 = sadd.s32 %s15, 1
        $region32: #{conv2d_forward.1} parent=23 // pred_fallthru
          _
      $region24: #{conv2d_forward.1} parent=5 // pred_fallthru
        _
      %p186 = scmp.le.s32.totalorder 1, %s15
      %p187 = scmp.lt.s32.totalorder %s15, 3
      %p188 = pnand %p186, %p187
      %p189 = pneg %p188
      // Predicated region
      $region33: #{conv2d_forward.1} parent=5 // pred_check
        _
      $region34: #{conv2d_forward.1} parent=5 // pred_check_branch
        %191 = sbr.rel (%p188) target = $region36
      $region35: #{conv2d_forward.1} parent=5 // pred_region
        %s192 = ssub.s32 %s15, 1
        // Predicated region
        $region37: #{conv2d_forward.1} parent=35 // pred_check
          %p193 = pneg %p36
        $region38: #{conv2d_forward.1} parent=35 // pred_check_branch
          %195 = sbr.rel (%p193) target = $region40
        $region39: #{conv2d_forward.1} parent=35 // pred_region
          %196 = dma.done [#allocation5], 16
        $region40: #{conv2d_forward.1} parent=35 // pred_fallthru
          _
        %197 = sfence
        %p198 = pneg %p36
        %p199 = pneg %p33
        %p200 = pneg %p57
        %p201 = pneg %p54
        %p202 = scmp.lt.s32.totalorder %s20, 2
        %s203 = scalar_select %p202, %s20, 2
        %s204 = smul.addr %s203, 8
        %s205 = scalar_lea.vmem %s2, %s204
        %p206 = pneg %p83
        %p207 = pneg %p80
        %s208 = sadd.s32 %s20, 1
        %p209 = scmp.lt.s32.totalorder %s208, 2
        %s210 = scalar_select %p209, %s208, 2
        %s211 = smul.addr %s210, 8
        %s212 = scalar_lea.vmem %s3, %s211
        %p213 = pneg %p111
        %p214 = pneg %p108
        %p215 = pneg %p137
        %p216 = pneg %p134
        %s217 = sand.u32 %s124, 1
        %s218 = scalar_lea.sflag [#allocation4], %s217
        %s219 = sand.u32 %s124, 1
        %s220 = smul.addr %s219, 8
        %s221 = scalar_lea.vmem [#allocation6], %s220
        %p222 = scmp.lt.s32.totalorder %s20, 2
        %s223 = scalar_select %p222, %s20, 2
        %s224 = smul.addr %s223, 8
        %s225 = scalar_lea.vmem %s2, %s224
        %s226 = sadd.s32 %s20, 1
        %p227 = scmp.lt.s32.totalorder %s226, 2
        %s228 = scalar_select %p227, %s226, 2
        %s229 = smul.addr %s228, 8
        %s230 = scalar_lea.vmem %s3, %s229
        %s231 = sadd.s32 %s20, 1
        %s232 = sld [smem:[#allocation3]]
        %s233 = sld [smem:[#allocation3 + $0x1]]
        %s234 = sld [smem:[#allocation3 + $0x2]]
        %s235 = sld [smem:[#allocation3 + $0x3]]
        %s236 = sld [smem:[#allocation2]]
        %v237 = vld [vmem:[%s225] sm:$0x7f]
        %v238 = vstv %s232
        %v239 = vmul.f32 %v238, %v237
        %v240 = vstv %s236
        %v241 = vadd.f32 %v239, %v240
        %242 = vrot.lane.b32.xlu0 %v237, 127
        %v243 = vpop.permute.xlu0 %242
        %v244 = vstv %s233
        %v245 = vmul.f32 %v244, %v243
        %v246 = vadd.f32 %v241, %v245
        %v247 = vld [vmem:[%s225 + $0x1] sm:$0x7f]
        %v248 = vstv %s234
        %v249 = vmul.f32 %v248, %v247
        %v250 = vadd.f32 %v246, %v249
        %251 = vrot.lane.b32.xlu0 %v247, 127
        %v252 = vpop.permute.xlu0 %251
        %v253 = vstv %s235
        %v254 = vmul.f32 %v253, %v252
        %v255 = vadd.f32 %v250, %v254
        %256 = vst [vmem:[%s221] sm:$0x7f] %v255
        %v257 = vld [vmem:[%s225 + $0x7] sm:$0x1]
        %v258 = vmul.f32 %v238, %v257
        %v259 = vadd.f32 %v258, %v240
        %260 = vrot.lane.b32.xlu0 %v257, 127
        %v261 = vpop.permute.xlu0 %260
        %v262 = vmul.f32 %v244, %v261
        %v263 = vadd.f32 %v259, %v262
        %v264 = vld [vmem:[%s230] sm:$0x1]
        %v265 = vmul.f32 %v248, %v264
        %v266 = vadd.f32 %v263, %v265
        %267 = vrot.lane.b32.xlu0 %v264, 127
        %v268 = vpop.permute.xlu0 %267
        %v269 = vmul.f32 %v253, %v268
        %v270 = vadd.f32 %v266, %v269
        %271 = vst [vmem:[%s221 + $0x7] sm:$0x1] %v270
        %s272 = sand.u32 %s124, 1
        %s273 = scalar_lea.sflag [#allocation4], %s272
        %s274 = sand.u32 %s124, 1
        %s275 = smul.addr %s274, 8
        %s276 = scalar_lea.vmem [#allocation6], %s275
        // Predicated region
        $region41: #{conv2d_forward.1} parent=35 // pred_check
          %p277 = pneg %p134
        $region42: #{conv2d_forward.1} parent=35 // pred_check_branch
          %279 = sbr.rel (%p277) target = $region44
        $region43: #{conv2d_forward.1} parent=35 // pred_region
          %s281 = ssub.s32 128, 128
          %282 = vsyncadd %s273, %s281
          %s283 = smul.addr %s20, 128
          %s284 = scalar_lea.hbm %s4, %s283
          %s286 = sshll.u32 %s276, 4
          %s287 = int_to_ptr.vmem [resolvable:$true] %s286
          %289 = dma.vmem_to_hbm [thread:$0]  %s287, 128, %s284, %s273
        $region44: #{conv2d_forward.1} parent=35 // pred_fallthru
          _
      $region36: #{conv2d_forward.1} parent=5 // pred_fallthru
        _
      %p290 = scmp.le.s32.totalorder 2, %s15
      // Predicated region
      $region45: #{conv2d_forward.1} parent=5 // pred_check
        %p291 = pneg %p290
      $region46: #{conv2d_forward.1} parent=5 // pred_check_branch
        %293 = sbr.rel (%p291) target = $region48
      $region47: #{conv2d_forward.1} parent=5 // pred_region
        %s294 = ssub.s32 %s15, 2
        // Predicated region
        $region49: #{conv2d_forward.1} parent=47 // pred_check
          %p295 = pneg %p140
        $region50: #{conv2d_forward.1} parent=47 // pred_check_branch
          %297 = sbr.rel (%p295) target = $region52
        $region51: #{conv2d_forward.1} parent=47 // pred_region
          %s298 = sand.u32 %s125, 1
          %s299 = scalar_lea.sflag [#allocation4], %s298
          %s300 = sand.u32 %s125, 1
          %s301 = smul.addr %s300, 8
          %s302 = scalar_lea.vmem [#allocation6], %s301
          %303 = dma.done %s299, 128
        $region52: #{conv2d_forward.1} parent=47 // pred_fallthru
          _
      $region48: #{conv2d_forward.1} parent=5 // pred_fallthru
        _
    $region6: #{conv2d_forward.1} parent=1 // loop_footer
      %s19 = sadd.s32 1, %s15
    $region7: #{conv2d_forward.1} parent=1 // loop_footer_branch
      %14 = sbr.rel target = $region3
    $region8: #{conv2d_forward.1} parent=1 // loop_exit
      _
    %304 = vsyncpa [#allocation4], 1
    %s305 = scalar_lea.sflag [#allocation4], 1
    %306 = vsyncpa %s305, 1
    %307 = vsyncpa [#allocation5], 1
    %s308 = scalar_lea.sflag [#allocation5], 1
    %309 = vsyncpa %s308, 1

</llo_original>
